<compile_context>
chip_gen: v7x
topology: tpu7x:2x2x1
jax: 0.10.0
libtpu: 0.0.40
codegen_flags: <defaults>
</compile_context>

<pallas_src>
import functools

import jax
import jax.numpy as jnp
from jax.experimental import pallas as pl
from jax.experimental.pallas import tpu as pltpu

NEG_SLOPE = 0.01        # F.leaky_relu default negative_slope
_LANE = 128             # TPU lane width: feature dims padded to this
_SUBLANE_BF16 = 16      # bf16 rows per packed sublane group


def _round_up(a, b):
    return ((a + b - 1) // b) * b


def _vmem_limit_bytes():
    cap = 128 * 1024 * 1024
    try:
        info = pltpu.get_tpu_info()
        cap = int(getattr(info, "vmem_capacity_bytes", cap))
    except Exception:
        pass
    # ~3/4 of physical, capped at 96 MiB -> 96 MiB on v5e/v6e, 48 MiB on v7x.
    return int(min(96 * 1024 * 1024, (cap * 3) // 4))


_VMEM_LIMIT = _vmem_limit_bytes()


def _make_mlp_kernel(n_layers):
    def kernel(x_ref, *rest):
        w_refs = rest[:n_layers]          # bf16, (in_pad, out_pad), VMEM-resident
        o_ref = rest[n_layers]
        a = x_ref[...].astype(jnp.bfloat16)   # no-op if x is already bf16
        for li in range(n_layers):
            y = jnp.dot(a, w_refs[li][...], preferred_element_type=jnp.float32)
            y = jnp.maximum(y, NEG_SLOPE * y)     # leaky_relu: mul + max
            if li + 1 < n_layers:
                a = y.astype(jnp.bfloat16)        # stays in vregs/VMEM
            else:
                o_ref[...] = y.astype(o_ref.dtype)
    return kernel


def _choose_tm(M):
    """Batch tile: multiple of 16, <=256, and >=2 grid steps when M allows."""
    tm = min(256, _round_up(M, _SUBLANE_BF16))
    if M >= 2 * _SUBLANE_BF16 and _round_up(M, tm) // tm < 2:
        # Split into >=2 parallel steps so both v7x TensorCores get work.
        tm = min(tm, _round_up((M + 1) // 2, _SUBLANE_BF16))
    return tm


@functools.partial(jax.jit, static_argnames=("d_out", "out_dtype"))
def mlp_forward(x, params, d_out, out_dtype=None):
    """Fused MLP forward.

    x:         (..., d_in) float32 or bfloat16 (bf16 halves the input DMA).
    params:    tuple of bf16 weights, (in_padded, out_padded) layout, feature
               dims zero-padded to multiples of 128 (see init_mlp_params).
    d_out:     true (un-padded) output feature count.
    out_dtype: output dtype (default x.dtype; pass bf16 to halve the write DMA).
    """
    if out_dtype is None:
        out_dtype = x.dtype
    n_layers = len(params)
    d0_pad = params[0].shape[0]
    dL_pad = params[-1].shape[1]

    lead_shape = x.shape[:-1]
    d0 = x.shape[-1]
    x2 = x.reshape((-1, d0))
    M = x2.shape[0]

    tm = _choose_tm(M)
    Mp = _round_up(M, tm)
    pad_m, pad_f = Mp - M, d0_pad - d0
    if pad_m or pad_f:
        x2 = jnp.pad(x2, ((0, pad_m), (0, pad_f)))

    grid = (Mp // tm,)

    # Full-extent weight blocks with a constant index_map: DMA'd once, resident
    # in VMEM across all batch tiles.  Single-buffer them when they are big
    # enough for the double-buffer to matter (v7x has only 64 MiB VMEM).
    w_bytes = sum(2 * w.shape[0] * w.shape[1] for w in params)
    single_buffer = hasattr(pl, "Buffered") and w_bytes > (2 << 20)

    in_specs = [pl.BlockSpec((tm, d0_pad), lambda i: (i, 0))]
    for w in params:
        if single_buffer:
            in_specs.append(pl.BlockSpec(w.shape, lambda i: (0, 0),
                                         pipeline_mode=pl.Buffered(1)))
        else:
            in_specs.append(pl.BlockSpec(w.shape, lambda i: (0, 0)))
    # TODO(synk): for very wide layers (padded K or N in the thousands) add
    # K/N tiling with a VMEM accumulator instead of full-extent weight blocks.

    out = pl.pallas_call(
        _make_mlp_kernel(n_layers),
        out_shape=jax.ShapeDtypeStruct((Mp, dL_pad), out_dtype),
        grid_spec=pltpu.PrefetchScalarGridSpec(
            num_scalar_prefetch=0,
            grid=grid,
            in_specs=in_specs,
            out_specs=pl.BlockSpec((tm, dL_pad), lambda i: (i, 0)),
        ),
        compiler_params=pltpu.CompilerParams(
            dimension_semantics=("parallel",),
            vmem_limit_bytes=_VMEM_LIMIT,
        ),
    )(x2, *params)

    out = out[:M, :d_out]
    return out.reshape(lead_shape + (d_out,))


def init_mlp_params(key, dims):
    """nn.Linear-like init (uniform +-1/sqrt(fan_in), bias=False).

    Weights are stored once as bf16 in (in, out) layout with both feature dims
    zero-padded to multiples of 128 (lane width) so every in-kernel matmul and
    store is lane-dense.  Returns (padded_bf16_params, unpadded_f32_params),
    the latter in PyTorch (out, in) layout for reference / interchange.
    """
    params, params_f32 = [], []
    for i in range(1, len(dims)):
        key, sub = jax.random.split(key)
        fan_in = dims[i - 1]
        bound = 1.0 / (fan_in ** 0.5)
        w = jax.random.uniform(sub, (dims[i], dims[i - 1]), dtype=jnp.float32,
                               minval=-bound, maxval=bound)
        params_f32.append(w)
        in_p, out_p = _round_up(dims[i - 1], _LANE), _round_up(dims[i], _LANE)
        w_pad = jnp.zeros((in_p, out_p), dtype=jnp.bfloat16)
        w_pad = w_pad.at[:dims[i - 1], :dims[i]].set(w.T.astype(jnp.bfloat16))
        params.append(w_pad)
    return tuple(params), tuple(params_f32)


def _reference(x, params_padded, d_out):
    """Pure-JAX reference mirroring the kernel math (bf16 operands, f32 acc)."""
    d0_pad = params_padded[0].shape[0]
    a = jnp.pad(x, ((0, 0), (0, d0_pad - x.shape[-1]))).astype(jnp.bfloat16)
    y = a
    for w in params_padded:
        y = jnp.dot(a, w, preferred_element_type=jnp.float32)
        y = jnp.maximum(y, NEG_SLOPE * y)
        a = y.astype(jnp.bfloat16)
    return y[:, :d_out].astype(x.dtype)


def _reference_torch_f32(x, params_f32):
    """Exact f32 math of the PyTorch module (leaky_relu after every layer)."""
    a = x
    for w in params_f32:
        a = a @ w.T
        a = jnp.where(a > 0, a, NEG_SLOPE * a)
    return a


if __name__ == "__main__":
    key = jax.random.PRNGKey(0)
    k_x, k_w = jax.random.split(key)

    batch = 8
    dims = [32, 64, 16]   # small MLP: 32 -> 64 -> 16

    x = jax.random.normal(k_x, (batch, dims[0]), dtype=jnp.float32)
    params, params_f32 = init_mlp_params(k_w, dims)

    y = mlp_forward(x, params, d_out=dims[-1])
    y = jax.block_until_ready(y)
    assert y.shape == (batch, dims[-1])
    assert y.dtype == x.dtype

    ref = _reference(x, params, dims[-1])
    err = float(jnp.max(jnp.abs(y - ref)))
    assert jnp.allclose(y, ref, atol=1e-3, rtol=1e-3), f"max abs err = {err}"

    # Loose check against the exact f32 PyTorch math (bf16 weight storage is
    # the agreed contract, so only bf16-rounding-level agreement is expected).
    ref32 = _reference_torch_f32(x, params_f32)
    assert jnp.allclose(y, ref32, atol=5e-2, rtol=5e-2)

    print("KERNEL_OK")
</pallas_src>

<mosaic_0001>
module attributes {stable_mosaic.version = 11 : i64} {
  func.func @kernel(%arg0: i32, %arg1: memref<16x128xf32, #tpu.memory_space<vmem>>, %arg2: memref<128x128xbf16, #tpu.memory_space<vmem>>, %arg3: memref<128x128xbf16, #tpu.memory_space<vmem>>, %arg4: memref<16x128xf32, #tpu.memory_space<vmem>>) attributes {dimension_semantics = [#tpu.dimension_semantics<parallel>], iteration_bounds = array<i64: 1>, scalar_prefetch = 0 : i64, scratch_operands = 0 : i64, tpu.core_type = #tpu.core_type<tc>, window_params = [{transform_indices = @transform_0, window_bounds = array<i64: 16, 128>}, {pipeline_mode = #tpu.pipeline_mode<synchronous>, transform_indices = @transform_1, window_bounds = array<i64: 128, 128>}, {pipeline_mode = #tpu.pipeline_mode<synchronous>, transform_indices = @transform_2, window_bounds = array<i64: 128, 128>}, {transform_indices = @transform_3, window_bounds = array<i64: 16, 128>}]} {
    %c0 = arith.constant 0 : index
    %c0_0 = arith.constant 0 : index
    %0 = vector.load %arg1[%c0, %c0_0] : memref<16x128xf32, #tpu.memory_space<vmem>>, vector<16x128xf32>
    %1 = arith.truncf %0 : vector<16x128xf32> to vector<16x128xbf16>
    %c0_1 = arith.constant 0 : index
    %c0_2 = arith.constant 0 : index
    %2 = vector.load %arg2[%c0_1, %c0_2] : memref<128x128xbf16, #tpu.memory_space<vmem>>, vector<128x128xbf16>
    %cst = arith.constant dense<0.000000e+00> : vector<16x128xf32>
    %3 = tpu.matmul %1, %2, %cst {dimension_numbers = #tpu.dot_dimension_numbers<[1], [0], [0], [1], [0, 0, 1, 1], [], []>} : vector<16x128xbf16>, vector<128x128xbf16>, vector<16x128xf32> -> vector<16x128xf32>
    %cst_3 = arith.constant 0.00999999977 : f32
    %4 = vector.broadcast %cst_3 : f32 to vector<16x128xf32>
    %5 = arith.mulf %4, %3 : vector<16x128xf32>
    %6 = arith.maximumf %3, %5 : vector<16x128xf32>
    %7 = arith.truncf %6 : vector<16x128xf32> to vector<16x128xbf16>
    %c0_4 = arith.constant 0 : index
    %c0_5 = arith.constant 0 : index
    %8 = vector.load %arg3[%c0_4, %c0_5] : memref<128x128xbf16, #tpu.memory_space<vmem>>, vector<128x128xbf16>
    %cst_6 = arith.constant dense<0.000000e+00> : vector<16x128xf32>
    %9 = tpu.matmul %7, %8, %cst_6 {dimension_numbers = #tpu.dot_dimension_numbers<[1], [0], [0], [1], [0, 0, 1, 1], [], []>} : vector<16x128xbf16>, vector<128x128xbf16>, vector<16x128xf32> -> vector<16x128xf32>
    %cst_7 = arith.constant 0.00999999977 : f32
    %10 = vector.broadcast %cst_7 : f32 to vector<16x128xf32>
    %11 = arith.mulf %10, %9 : vector<16x128xf32>
    %12 = arith.maximumf %9, %11 : vector<16x128xf32>
    %c0_8 = arith.constant 0 : index
    %c0_9 = arith.constant 0 : index
    %13 = vector.load %arg4[%c0_8, %c0_9] : memref<16x128xf32, #tpu.memory_space<vmem>>, vector<16x128xf32>
    tpu.vector_store %arg4[%c0_8, %c0_9], %12 {strides = array<i32>} : memref<16x128xf32, #tpu.memory_space<vmem>>, vector<16x128xf32>,
    return
  }
  func.func @transform_0(%arg0: i32) -> (i32, i32) {
    %c0_i32 = arith.constant 0 : i32
    %c0_i32_0 = arith.constant 0 : i32
    return %arg0, %c0_i32 : i32, i32
  }
  func.func @transform_1(%arg0: i32) -> (i32, i32) {
    %c0_i32 = arith.constant 0 : i32
    %c0_i32_0 = arith.constant 0 : i32
    %c0_i32_1 = arith.constant 0 : i32
    return %c0_i32, %c0_i32_0 : i32, i32
  }
  func.func @transform_2(%arg0: i32) -> (i32, i32) {
    %c0_i32 = arith.constant 0 : i32
    %c0_i32_0 = arith.constant 0 : i32
    %c0_i32_1 = arith.constant 0 : i32
    return %c0_i32, %c0_i32_0 : i32, i32
  }
  func.func @transform_3(%arg0: i32) -> (i32, i32) {
    %c0_i32 = arith.constant 0 : i32
    %c0_i32_0 = arith.constant 0 : i32
    return %arg0, %c0_i32 : i32, i32
  }
}

</mosaic_0001>

<llo_original>
// kernel: mlp_forward.1
$region0: #{mlp_forward.1}
  #allocation0 [shape = 'u32[]', space=smem, size = 0x4, offset = 0x4, fixed_abs, tag = 'smem constant byte address 0x4 - core index']
  #allocation1 [shape = 'u32[144,128]{1,0:T(1,128)}', space=vmem, size = 0x12000, scoped, tag = 'internal scratch']
  %s0 = inlined_call_operand.hbm [shape: f32[16,128], index: 0, kind: input, shape index: {}]
  %s1 = inlined_call_operand.hbm [shape: bf16[128,128], index: 1, kind: input, shape index: {}]
  %s2 = inlined_call_operand.hbm [shape: bf16[128,128], index: 2, kind: input, shape index: {}]
  %s3 = inlined_call_operand.hbm [shape: f32[16,128], index: 3, kind: output, shape index: {}]
  %s4 = sld [smem:[#allocation0]]
  $region34: #{mlp_forward.1} parent=0
    _
  %s6 = ssub.s32 1, %s4
  %s7 = scalar_select 0, %s6, %s4
  $region1: #{mlp_forward.1} parent=0
    #allocation2 [shape = 'u8[8192]{0}', space=vmem, size = 0x2000, scoped, tag = 'input window, operand 0, single buffered']
    #allocation3 [shape = 's32[1]{0}', space=sflag, size = 0x4, scoped, tag = 'scoped memory for mlp_forward.1']
    #allocation4 [shape = 's32[1]{0}', space=sflag, size = 0x4, scoped, tag = 'scoped memory for mlp_forward.1']
    #allocation5 [shape = 'u8[32768]{0}', space=vmem, size = 0x8000, scoped, tag = 'input window, operand 1, single buffered']
    #allocation6 [shape = 's32[1]{0}', space=sflag, size = 0x4, scoped, tag = 'scoped memory for mlp_forward.1']
    #allocation7 [shape = 'u8[32768]{0}', space=vmem, size = 0x8000, scoped, tag = 'input window, operand 2, single buffered']
    #allocation8 [shape = 'u8[8192]{0}', space=vmem, size = 0x2000, scoped, tag = 'output window, operand 0, single buffered']
    %8 = vsyncpa [#allocation3], 0
    %9 = vsyncpa [#allocation6], 0
    %10 = vsyncpa [#allocation4], 0
    // Predicated region
    $region2: #{mlp_forward.1} parent=1 // pred_check
      _
    $region3: #{mlp_forward.1} parent=1 // pred_check_branch
      %12 = sbr.rel (0) target = $region5
    $region4: #{mlp_forward.1} parent=1 // pred_region
      %s14 = ssub.s32 256, 256
      %15 = vsyncadd [#allocation3], %s14
      %s16 = sshll.u32 [#allocation2], 4
      %s17 = int_to_ptr.vmem [resolvable:$true] %s16
      %22 = dma.hbm_to_vmem [thread:$0]  %s0, 256, %s17, [#allocation3], 128, 128, 8
    $region5: #{mlp_forward.1} parent=1 // pred_fallthru
      _
    // Predicated region
    $region6: #{mlp_forward.1} parent=1 // pred_check
      _
    $region7: #{mlp_forward.1} parent=1 // pred_check_branch
      %24 = sbr.rel (0) target = $region9
    $region8: #{mlp_forward.1} parent=1 // pred_region
      %s26 = ssub.s32 1024, 1024
      %27 = vsyncadd [#allocation6], %s26
      %s28 = sshll.u32 [#allocation5], 4
      %s29 = int_to_ptr.vmem [resolvable:$true] %s28
      %34 = dma.hbm_to_vmem [thread:$0]  %s1, 1024, %s29, [#allocation6], 64, 64, 4
    $region9: #{mlp_forward.1} parent=1 // pred_fallthru
      _
    // Predicated region
    $region10: #{mlp_forward.1} parent=1 // pred_check
      _
    $region11: #{mlp_forward.1} parent=1 // pred_check_branch
      %36 = sbr.rel (0) target = $region13
    $region12: #{mlp_forward.1} parent=1 // pred_region
      %s38 = ssub.s32 1024, 1024
      %39 = vsyncadd [#allocation6], %s38
      %s40 = sshll.u32 [#allocation7], 4
      %s41 = int_to_ptr.vmem [resolvable:$true] %s40
      %46 = dma.hbm_to_vmem [thread:$0]  %s2, 1024, %s41, [#allocation6], 64, 64, 4
    $region13: #{mlp_forward.1} parent=1 // pred_fallthru
      _
    // Predicated region
    $region14: #{mlp_forward.1} parent=1 // pred_check
      _
    $region15: #{mlp_forward.1} parent=1 // pred_check_branch
      %48 = sbr.rel (0) target = $region17
    $region16: #{mlp_forward.1} parent=1 // pred_region
      %49 = dma.done [#allocation3], 256
    $region17: #{mlp_forward.1} parent=1 // pred_fallthru
      _
    // Predicated region
    $region18: #{mlp_forward.1} parent=1 // pred_check
      _
    $region19: #{mlp_forward.1} parent=1 // pred_check_branch
      %51 = sbr.rel (0) target = $region21
    $region20: #{mlp_forward.1} parent=1 // pred_region
      %52 = dma.done [#allocation6], 1024
    $region21: #{mlp_forward.1} parent=1 // pred_fallthru
      _
    // Predicated region
    $region22: #{mlp_forward.1} parent=1 // pred_check
      _
    $region23: #{mlp_forward.1} parent=1 // pred_check_branch
      %54 = sbr.rel (0) target = $region25
    $region24: #{mlp_forward.1} parent=1 // pred_region
      %55 = dma.done [#allocation6], 1024
    $region25: #{mlp_forward.1} parent=1 // pred_fallthru
      _
    %v57 = vld [vmem:[#allocation2] sm:$0xff]
    %v58 = vld [vmem:[#allocation2 + $0x8] sm:$0xff]
    %v59 = vpack.c.bf16 %v58, %v57
    %v60 = vld [vmem:[#allocation5] sm:$0xf]
    %v61 = vld [vmem:[#allocation5 + $0x4] sm:$0xf]
    %v62 = vld [vmem:[#allocation5 + $0x8] sm:$0xf]
    %v63 = vld [vmem:[#allocation5 + $0xc] sm:$0xf]
    %v64 = vld [vmem:[#allocation5 + $0x10] sm:$0xf]
    %v65 = vld [vmem:[#allocation5 + $0x14] sm:$0xf]
    %v66 = vld [vmem:[#allocation5 + $0x18] sm:$0xf]
    %v67 = vld [vmem:[#allocation5 + $0x1c] sm:$0xf]
    %v68 = vld [vmem:[#allocation5 + $0x20] sm:$0xf]
    %v69 = vld [vmem:[#allocation5 + $0x24] sm:$0xf]
    %v70 = vld [vmem:[#allocation5 + $0x28] sm:$0xf]
    %v71 = vld [vmem:[#allocation5 + $0x2c] sm:$0xf]
    %v72 = vld [vmem:[#allocation5 + $0x30] sm:$0xf]
    %v73 = vld [vmem:[#allocation5 + $0x34] sm:$0xf]
    %v74 = vld [vmem:[#allocation5 + $0x38] sm:$0xf]
    %v75 = vld [vmem:[#allocation5 + $0x3c] sm:$0xf]
    %v92 = vunpack.c.l.b16 %v60
    %v93 = vunpack.c.l.b16 %v61
    %v94 = vunpack.c.l.b16 %v62
    %v95 = vunpack.c.l.b16 %v63
    %v96 = vunpack.c.l.b16 %v64
    %v97 = vunpack.c.l.b16 %v65
    %v98 = vunpack.c.l.b16 %v66
    %v99 = vunpack.c.l.b16 %v67
    %v100 = vunpack.c.l.b16 %v68
    %v101 = vunpack.c.l.b16 %v69
    %v102 = vunpack.c.l.b16 %v70
    %v103 = vunpack.c.l.b16 %v71
    %v104 = vunpack.c.l.b16 %v72
    %v105 = vunpack.c.l.b16 %v73
    %v106 = vunpack.c.l.b16 %v74
    %v107 = vunpack.c.l.b16 %v75
    %v108 = vpack.c.b16 %v93, %v92
    %v109 = vpack.c.b16 %v95, %v94
    %v110 = vpack.c.b16 %v97, %v96
    %v111 = vpack.c.b16 %v99, %v98
    %v112 = vpack.c.b16 %v101, %v100
    %v113 = vpack.c.b16 %v103, %v102
    %v114 = vpack.c.b16 %v105, %v104
    %v115 = vpack.c.b16 %v107, %v106
    %124 = vmatprep.subr.bf16.mxu0 0
    %125 = vmatpush1.bf16.msra.mxu0 %v108
    %126 = vmatprep.subr.bf16.mxu0 0
    %127 = vmatpush1.bf16.msra.mxu0 %v109
    %128 = vmatprep.subr.bf16.mxu0 0
    %129 = vmatpush1.bf16.msra.mxu0 %v110
    %130 = vmatprep.subr.bf16.mxu0 0
    %131 = vmatpush1.bf16.msra.mxu0 %v111
    %132 = vmatprep.subr.bf16.mxu0 0
    %133 = vmatpush1.bf16.msra.mxu0 %v112
    %134 = vmatprep.subr.bf16.mxu0 0
    %135 = vmatpush1.bf16.msra.mxu0 %v113
    %136 = vmatprep.subr.bf16.mxu0 0
    %137 = vmatpush1.bf16.msra.mxu0 %v114
    %138 = vmatprep.subr.bf16.mxu0 0
    %139 = vmatpush1.bf16.msra.mxu0 %v115
    %140 = vmatprep.subr.bf16.mxu0 0
    %141 = vmatpush1.bf16.msra.mxu0 0
    %142 = vmatprep.subr.bf16.mxu0 0
    %143 = vmatpush1.bf16.msra.mxu0 0
    %144 = vmatprep.subr.bf16.mxu0 0
    %145 = vmatpush1.bf16.msra.mxu0 0
    %146 = vmatprep.subr.bf16.mxu0 0
    %147 = vmatpush1.bf16.msra.mxu0 0
    %148 = vmatprep.subr.bf16.mxu0 0
    %149 = vmatpush1.bf16.msra.mxu0 0
    %150 = vmatprep.subr.bf16.mxu0 0
    %151 = vmatpush1.bf16.msra.mxu0 0
    %152 = vmatprep.subr.bf16.mxu0 0
    %153 = vmatpush1.bf16.msra.mxu0 0
    %154 = vmatprep.subr.bf16.mxu0 0
    %155 = vmatpush1.bf16.msra.mxu0 0
    %156 = vmatprep.mubr.bf16.mxu0 0
    %157 = vmatmul.mubr.bf16.gmra.mrb[0].mxu0 %v59
    %v158 = vpop.f32.mrb[0].mxu0
    %v159 = vadd.f32 0.0, %v158
    %v160 = vpop.f32.mrb[0].mxu0
    %v161 = vpop.f32.mrb[0].mxu0
    %v162 = vadd.f32 0.0, %v161
    %v163 = vpop.f32.mrb[0].mxu0
    %164 = vdwg.mxu0
    %v165 = vmul.f32 %v159, 0.01
    %v166 = vmul.f32 %v162, 0.01
    %v167 = vmax.f32 %v159, %v165
    %v168 = vmax.f32 %v162, %v166
    %v169 = vpack.c.bf16 %v168, %v167
    %v170 = vld [vmem:[#allocation7] sm:$0xf]
    %v171 = vld [vmem:[#allocation7 + $0x4] sm:$0xf]
    %v172 = vld [vmem:[#allocation7 + $0x8] sm:$0xf]
    %v173 = vld [vmem:[#allocation7 + $0xc] sm:$0xf]
    %v174 = vld [vmem:[#allocation7 + $0x10] sm:$0xf]
    %v175 = vld [vmem:[#allocation7 + $0x14] sm:$0xf]
    %v176 = vld [vmem:[#allocation7 + $0x18] sm:$0xf]
    %v177 = vld [vmem:[#allocation7 + $0x1c] sm:$0xf]
    %v178 = vld [vmem:[#allocation7 + $0x20] sm:$0xf]
    %v179 = vld [vmem:[#allocation7 + $0x24] sm:$0xf]
    %v180 = vld [vmem:[#allocation7 + $0x28] sm:$0xf]
    %v181 = vld [vmem:[#allocation7 + $0x2c] sm:$0xf]
    %v182 = vld [vmem:[#allocation7 + $0x30] sm:$0xf]
    %v183 = vld [vmem:[#allocation7 + $0x34] sm:$0xf]
    %v184 = vld [vmem:[#allocation7 + $0x38] sm:$0xf]
    %v185 = vld [vmem:[#allocation7 + $0x3c] sm:$0xf]
    %v202 = vunpack.c.l.b16 %v170
    %v203 = vunpack.c.l.b16 %v171
    %v204 = vunpack.c.l.b16 %v172
    %v205 = vunpack.c.l.b16 %v173
    %v206 = vunpack.c.l.b16 %v174
    %v207 = vunpack.c.l.b16 %v175
    %v208 = vunpack.c.l.b16 %v176
    %v209 = vunpack.c.l.b16 %v177
    %v210 = vunpack.c.l.b16 %v178
    %v211 = vunpack.c.l.b16 %v179
    %v212 = vunpack.c.l.b16 %v180
    %v213 = vunpack.c.l.b16 %v181
    %v214 = vunpack.c.l.b16 %v182
    %v215 = vunpack.c.l.b16 %v183
    %v216 = vunpack.c.l.b16 %v184
    %v217 = vunpack.c.l.b16 %v185
    %v218 = vpack.c.b16 %v203, %v202
    %v219 = vpack.c.b16 %v205, %v204
    %v220 = vpack.c.b16 %v207, %v206
    %v221 = vpack.c.b16 %v209, %v208
    %v222 = vpack.c.b16 %v211, %v210
    %v223 = vpack.c.b16 %v213, %v212
    %v224 = vpack.c.b16 %v215, %v214
    %v225 = vpack.c.b16 %v217, %v216
    %234 = vmatprep.subr.bf16.mxu0 0
    %235 = vmatpush1.bf16.msra.mxu0 %v218
    %236 = vmatprep.subr.bf16.mxu0 0
    %237 = vmatpush1.bf16.msra.mxu0 %v219
    %238 = vmatprep.subr.bf16.mxu0 0
    %239 = vmatpush1.bf16.msra.mxu0 %v220
    %240 = vmatprep.subr.bf16.mxu0 0
    %241 = vmatpush1.bf16.msra.mxu0 %v221
    %242 = vmatprep.subr.bf16.mxu0 0
    %243 = vmatpush1.bf16.msra.mxu0 %v222
    %244 = vmatprep.subr.bf16.mxu0 0
    %245 = vmatpush1.bf16.msra.mxu0 %v223
    %246 = vmatprep.subr.bf16.mxu0 0
    %247 = vmatpush1.bf16.msra.mxu0 %v224
    %248 = vmatprep.subr.bf16.mxu0 0
    %249 = vmatpush1.bf16.msra.mxu0 %v225
    %250 = vmatprep.subr.bf16.mxu0 0
    %251 = vmatpush1.bf16.msra.mxu0 0
    %252 = vmatprep.subr.bf16.mxu0 0
    %253 = vmatpush1.bf16.msra.mxu0 0
    %254 = vmatprep.subr.bf16.mxu0 0
    %255 = vmatpush1.bf16.msra.mxu0 0
    %256 = vmatprep.subr.bf16.mxu0 0
    %257 = vmatpush1.bf16.msra.mxu0 0
    %258 = vmatprep.subr.bf16.mxu0 0
    %259 = vmatpush1.bf16.msra.mxu0 0
    %260 = vmatprep.subr.bf16.mxu0 0
    %261 = vmatpush1.bf16.msra.mxu0 0
    %262 = vmatprep.subr.bf16.mxu0 0
    %263 = vmatpush1.bf16.msra.mxu0 0
    %264 = vmatprep.subr.bf16.mxu0 0
    %265 = vmatpush1.bf16.msra.mxu0 0
    %266 = vmatprep.mubr.bf16.mxu0 0
    %267 = vmatmul.mubr.bf16.gmra.mrb[0].mxu0 %v169
    %v268 = vpop.f32.mrb[0].mxu0
    %v269 = vadd.f32 0.0, %v268
    %v270 = vpop.f32.mrb[0].mxu0
    %v271 = vpop.f32.mrb[0].mxu0
    %v272 = vadd.f32 0.0, %v271
    %v273 = vpop.f32.mrb[0].mxu0
    %274 = vdwg.mxu0
    %v275 = vmul.f32 %v269, 0.01
    %v276 = vmul.f32 %v272, 0.01
    %v277 = vmax.f32 %v269, %v275
    %v278 = vmax.f32 %v272, %v276
    %279 = vst [vmem:[#allocation8] sm:$0xff] %v277
    %280 = vst [vmem:[#allocation8 + $0x8] sm:$0xff] %v278
    // Predicated region
    $region26: #{mlp_forward.1} parent=1 // pred_check
      _
    $region27: #{mlp_forward.1} parent=1 // pred_check_branch
      %282 = sbr.rel (0) target = $region29
    $region28: #{mlp_forward.1} parent=1 // pred_region
      %s284 = ssub.s32 256, 256
      %285 = vsyncadd [#allocation4], %s284
      %s286 = sshll.u32 [#allocation8], 4
      %s287 = int_to_ptr.vmem [resolvable:$true] %s286
      %292 = dma.vmem_to_hbm [thread:$0]  %s287, 256, %s3, [#allocation4], 128, 128, 8
    $region29: #{mlp_forward.1} parent=1 // pred_fallthru
      _
    // Predicated region
    $region30: #{mlp_forward.1} parent=1 // pred_check
      _
    $region31: #{mlp_forward.1} parent=1 // pred_check_branch
      %294 = sbr.rel (0) target = $region33
    $region32: #{mlp_forward.1} parent=1 // pred_region
      %295 = dma.done [#allocation4], 256
    $region33: #{mlp_forward.1} parent=1 // pred_fallthru
      _
    %296 = vsyncpa [#allocation3], 1
    %297 = vsyncpa [#allocation6], 1
    %298 = vsyncpa [#allocation4], 1

</llo_original>
